<compile_context>
chip_gen: v6e
topology: v6e:2x2x1
jax: 0.10.0
libtpu: 0.0.40
codegen_flags: <defaults>
</compile_context>

<pallas_src>
import jax
import jax.numpy as jnp
from jax.experimental import pallas as pl
from jax.experimental.pallas import tpu as pltpu


# ----------------------------------------------------------------------------- kernel
def _patch_embed_kernel(x_ref, w_ref, b_ref, o_ref):
    # (tile_m, K) @ (K, tile_n) on the MXU with an f32 accumulator, + bias.
    acc = jnp.dot(x_ref[...], w_ref[...], preferred_element_type=jnp.float32)
    o_ref[...] = (acc + b_ref[...]).astype(o_ref.dtype)


# ----------------------------------------------------------------------------- helpers
def _cdiv(a, b):
    return -(-a // b)


def _round_up(x, m):
    return ((x + m - 1) // m) * m


def _vmem_budget_bytes():
    """Generation-aware VMEM budget (headroom under the physical capacity)."""
    try:
        cap = pltpu.get_tpu_info().vmem_capacity_bytes
    except Exception:
        cap = 64 << 20            # conservative: v7x per-TensorCore VMEM
    # ~70% of physical, capped: ~45 MiB on v7x, ~90 MiB on v5e/v6e.
    return int(min(cap * 7 // 10, 96 << 20))


_SINGLE_BUFFER_OK = None


def _single_buffer_supported():
    """Probe once whether BlockSpec(pipeline_mode=pl.Buffered(1)) lowers here."""
    global _SINGLE_BUFFER_OK
    if _SINGLE_BUFFER_OK is None:
        try:
            def _k(x_ref, o_ref):
                o_ref[...] = x_ref[...] + 1.0

            out = pl.pallas_call(
                _k,
                out_shape=jax.ShapeDtypeStruct((8, 128), jnp.float32),
                grid=(1,),
                in_specs=[pl.BlockSpec((8, 128), lambda i: (0, 0),
                                       pipeline_mode=pl.Buffered(1))],
                out_specs=pl.BlockSpec((8, 128), lambda i: (0, 0)),
            )(jnp.zeros((8, 128), jnp.float32))
            jax.block_until_ready(out)
            _SINGLE_BUFFER_OK = True
        except Exception:
            _SINGLE_BUFFER_OK = False
    return _SINGLE_BUFFER_OK


def _choose_tiles(M, K, N, *, in_bytes, out_bytes, budget, single_buffer_ok):
    """Pick MXU-friendly (tile_m, tile_n) fitting the per-generation VMEM budget."""

    def ws(tm, tn, w_bufs):
        # patches + output are double-buffered by the pipeline; the weight/bias
        # blocks are single-buffered only when their block index is constant.
        return (2 * tm * K * in_bytes
                + w_bufs * (K * tn * in_bytes + tn * 4)
                + 2 * tm * tn * out_bytes)

    if M <= 16:
        tile_m = M                                   # tiny problem: one full-M block
    elif M <= 1024:
        # >= 2 M-steps even at small batch: megacore sharding + DMA/compute overlap.
        tile_m = max(8, _round_up(_cdiv(M, 2), 8))
    else:
        tile_m = 512                                 # long uninterrupted MXU streams

    w_bufs = 1 if single_buffer_ok else 2
    tile_n = N
    # Prefer shrinking tile_m (weight stays resident, fetched exactly once)
    # before giving up N-residency.
    while ws(tile_m, tile_n, w_bufs) > budget and tile_m > 64:
        tile_m = max(64, _round_up(tile_m // 2, 8))
    if ws(tile_m, tile_n, w_bufs) > budget:
        # Weight cannot stay resident: tile N lane-densely (multiples of 128);
        # the weight block index now varies, so it double-buffers again.
        w_bufs = 2
        tile_n = max(128, _round_up(_cdiv(N, 2), 128))
        while ws(tile_m, tile_n, w_bufs) > budget and tile_n > 128:
            tile_n = max(128, _round_up(tile_n // 2, 128))
    return tile_m, tile_n


def _proj_matmul(patches, weight, bias, *, out_dtype, tile_m=None, tile_n=None):
    """patches (M, K) @ weight (K, N) + bias (1, N) -> (M, N), tiled on (N, M)."""
    M, K = patches.shape
    Kw, N = weight.shape
    assert K == Kw
    in_bytes = patches.dtype.itemsize
    out_bytes = jnp.dtype(out_dtype).itemsize

    budget = _vmem_budget_bytes()
    single_ok = _single_buffer_supported()
    auto_m, auto_n = _choose_tiles(M, K, N, in_bytes=in_bytes, out_bytes=out_bytes,
                                   budget=budget, single_buffer_ok=single_ok)
    tile_m = auto_m if tile_m is None else tile_m
    tile_n = auto_n if tile_n is None else tile_n
    num_m = _cdiv(M, tile_m)
    num_n = _cdiv(N, tile_n)

    # Grid is (N-steps outer, M-steps inner): the weight/bias block index is
    # constant along the inner axis, so each weight block is DMA'd exactly once
    # for the whole grid (patches, the smaller stream when N is tiled, re-read).
    grid = (num_n, num_m)

    resident_w = (tile_n == N)          # weight/bias block index constant over grid
    single_buffer_w = resident_w and single_ok
    w_bufs = 1 if single_buffer_w else 2
    ws = (2 * tile_m * K * in_bytes
          + w_bufs * (K * tile_n * in_bytes + tile_n * bias.dtype.itemsize)
          + 2 * tile_m * tile_n * out_bytes)
    # Explicit limit: working set + ~20% headroom (+4 MiB internal scratch),
    # floored at 32 MiB, capped at the per-generation budget.
    vmem_limit = int(min(budget, max(32 << 20, int(ws * 1.2) + (4 << 20))))

    x_spec = pl.BlockSpec((tile_m, K), lambda j, i: (i, 0))
    if single_buffer_w:
        # Constant blocks: no point burning a second VMEM copy on them.
        w_spec = pl.BlockSpec((K, tile_n), lambda j, i: (0, j),
                              pipeline_mode=pl.Buffered(1))
        b_spec = pl.BlockSpec((1, tile_n), lambda j, i: (0, j),
                              pipeline_mode=pl.Buffered(1))
    else:
        w_spec = pl.BlockSpec((K, tile_n), lambda j, i: (0, j))
        b_spec = pl.BlockSpec((1, tile_n), lambda j, i: (0, j))
    o_spec = pl.BlockSpec((tile_m, tile_n), lambda j, i: (i, j))

    cost = pl.CostEstimate(
        flops=2 * M * K * N,
        transcendentals=0,
        bytes_accessed=(num_n * M * K * in_bytes      # patches re-read per N tile
                        + K * N * in_bytes            # weight fetched once
                        + N * bias.dtype.itemsize
                        + M * N * out_bytes))

    return pl.pallas_call(
        _patch_embed_kernel,
        out_shape=jax.ShapeDtypeStruct((M, N), out_dtype),
        grid_spec=pltpu.PrefetchScalarGridSpec(
            num_scalar_prefetch=0,
            grid=grid,
            in_specs=[x_spec, w_spec, b_spec],
            out_specs=o_spec),
        compiler_params=pltpu.CompilerParams(
            # Both grid axes are independent -> megacore sharding on v7x.
            dimension_semantics=("parallel", "parallel"),
            vmem_limit_bytes=vmem_limit,
            # Let XLA fuse the cast+patchify chain into the kernel's input DMA
            # (under jit), removing the extra HBM round trip on the activations.
            allow_input_fusion=[True, False, False]),
        cost_estimate=cost,
    )(patches, weight, bias)


# ----------------------------------------------------------------------------- module
class PatchEmbed:
    """JAX/Pallas port of the PyTorch PatchEmbed module (norm_layer=None)."""

    def __init__(self, img_size=224, patch_size=16, in_chans=3, embed_dim=768,
                 flatten=True, *, key=None, param_dtype=jnp.float32,
                 compute_dtype=jnp.bfloat16, out_dtype=None):
        to2 = lambda v: (v, v) if isinstance(v, int) else tuple(v)
        self.img_size = to2(img_size)
        self.patch_size = to2(patch_size)
        self.patch_shape = (self.img_size[0] // self.patch_size[0],
                            self.img_size[1] // self.patch_size[1])
        self.num_patches = self.patch_shape[0] * self.patch_shape[1]
        self.flatten = flatten
        self.in_chans = in_chans
        self.embed_dim = embed_dim
        self.param_dtype = param_dtype
        self.compute_dtype = compute_dtype
        # bf16 output by default (downstream ViT layers consume bf16); pass
        # out_dtype=jnp.float32 to match the PyTorch conv output dtype exactly.
        self.out_dtype = compute_dtype if out_dtype is None else out_dtype

        if key is None:
            key = jax.random.PRNGKey(0)
        kw, kb = jax.random.split(key)
        ph, pw = self.patch_size
        fan_in = in_chans * ph * pw
        # Deterministic synthetic init, same shapes as nn.Conv2d(in, out, p, p).
        self.proj_weight = (jax.random.normal(
            kw, (embed_dim, in_chans, ph, pw), param_dtype)
            * (1.0 / fan_in ** 0.5))
        self.proj_bias = (jax.random.normal(kb, (embed_dim,), param_dtype)
                          * (1.0 / fan_in ** 0.5))

        # Hoisted, kernel-ready layouts (computed once, not per forward call):
        #   (N, C, ph, pw) -> (K, N) bf16 ; bias -> (1, N) f32.
        self.w_kn = jnp.asarray(
            self.proj_weight.reshape(embed_dim, fan_in).T, compute_dtype)
        self.b_1n = self.proj_bias.reshape(1, embed_dim).astype(jnp.float32)
        # self.norm is Identity (norm_layer=None in the reference default).

    def __call__(self, x, *, tile_m=None, tile_n=None):
        # x: (B, C, H, W)  -- NCHW, same as PyTorch.
        B, C, H, W = x.shape
        ph, pw = self.patch_size
        Hp, Wp = H // ph, W // pw

        # Cast first so that, if the patchify is materialized, it moves bf16
        # (half the bytes).  Under jit, allow_input_fusion lets XLA fold this
        # whole chain into the Pallas input DMA instead.
        # TODO(synk): an explicit in-kernel (C,ph,pw)->K gather via a 6-D
        # BlockSpec + XLU shuffle would guarantee zero extra HBM passes even
        # when XLA declines the fusion; kept in XLA here for robust lowering.
        xc = x.astype(self.compute_dtype)
        patches = xc.reshape(B, C, Hp, ph, Wp, pw)                # layout only
        patches = jnp.transpose(patches, (0, 2, 4, 1, 3, 5))      # (B,Hp,Wp,C,ph,pw)
        patches = patches.reshape(B * Hp * Wp, C * ph * pw)       # (M, K)

        out = _proj_matmul(patches, self.w_kn, self.b_1n,
                           out_dtype=self.out_dtype,
                           tile_m=tile_m, tile_n=tile_n)          # (M, N)

        if self.flatten:
            # proj(x).flatten(2).transpose(1, 2): the row ordering of `patches`
            # is already (b, hp, wp) row-major, identical to the flattened
            # NCHW conv output.
            out = out.reshape(B, Hp * Wp, self.embed_dim)
        else:
            out = out.reshape(B, Hp, Wp, self.embed_dim).transpose(0, 3, 1, 2)

        # self.norm = Identity
        return out, Hp, Wp


# ----------------------------------------------------------------------------- reference
def _reference(x, weight, bias, patch_size, compute_dtype):
    """Pure-JAX reference of the PyTorch forward (bf16 operands, f32 accum)."""
    y = jax.lax.conv_general_dilated(
        x.astype(compute_dtype), weight.astype(compute_dtype),
        window_strides=patch_size, padding="VALID",
        dimension_numbers=("NCHW", "OIHW", "NCHW"),
        preferred_element_type=jnp.float32)
    y = y + bias[None, :, None, None].astype(jnp.float32)
    B, D, Hp, Wp = y.shape
    return y.reshape(B, D, Hp * Wp).transpose(0, 2, 1), Hp, Wp


if __name__ == "__main__":
    key = jax.random.PRNGKey(0)
    k_in, k_mod, k_in2, k_mod2 = jax.random.split(key, 4)

    # --- case 1: small shapes from the module spec; jitted so the patchify
    # chain is eligible to fuse into the kernel's input DMA. -----------------
    B, C, S, patch, embed_dim = 2, 4, 16, 8, 128
    x = jax.random.normal(k_in, (B, C, S, S), jnp.float32)
    mod = PatchEmbed(img_size=S, patch_size=patch, in_chans=C,
                     embed_dim=embed_dim, key=k_mod)
    fwd = jax.jit(lambda inp: mod(inp)[0])
    out = jax.block_until_ready(fwd(x))
    ref, Hr, Wr = _reference(x, mod.proj_weight, mod.proj_bias,
                             mod.patch_size, mod.compute_dtype)
    assert mod.patch_shape == (Hr, Wr)
    assert out.shape == (B, mod.num_patches, embed_dim)
    assert jnp.allclose(out.astype(jnp.float32), ref, atol=2e-2, rtol=2e-2)

    # --- case 2: explicit tiles forcing a multi-step (N-outer, M-inner) grid
    # with a masked tail M-tile and a tiled-N weight path. -------------------
    B2, C2, S2, patch2, embed2 = 2, 3, 32, 4, 256
    x2 = jax.random.normal(k_in2, (B2, C2, S2, S2), jnp.float32)
    mod2 = PatchEmbed(img_size=S2, patch_size=patch2, in_chans=C2,
                      embed_dim=embed2, key=k_mod2)
    # M=128, K=48, N=256 -> grid (2, 3) with a masked tail M-tile.
    out2, H2, W2 = mod2(x2, tile_m=48, tile_n=128)
    out2 = jax.block_until_ready(out2)
    ref2, Hr2, Wr2 = _reference(x2, mod2.proj_weight, mod2.proj_bias,
                                mod2.patch_size, mod2.compute_dtype)
    assert (H2, W2) == (Hr2, Wr2)
    assert out2.shape == (B2, mod2.num_patches, embed2)
    assert jnp.allclose(out2.astype(jnp.float32), ref2, atol=2e-2, rtol=2e-2)

    print("KERNEL_OK")
</pallas_src>

<mosaic_0001>
module attributes {stable_mosaic.version = 11 : i64} {
  func.func @_patch_embed_kernel(%arg0: i32, %arg1: i32, %arg2: memref<8x256xbf16, #tpu.memory_space<vmem>>, %arg3: memref<256x128xbf16, #tpu.memory_space<vmem>>, %arg4: memref<1x128xf32, #tpu.memory_space<vmem>>, %arg5: memref<8x128xbf16, #tpu.memory_space<vmem>>) attributes {dimension_semantics = [#tpu.dimension_semantics<parallel>, #tpu.dimension_semantics<parallel>], iteration_bounds = array<i64: 1, 1>, scalar_prefetch = 0 : i64, scratch_operands = 0 : i64, tpu.core_type = #tpu.core_type<tc>, window_params = [{transform_indices = @transform_0, window_bounds = array<i64: 8, 256>}, {pipeline_mode = #tpu.pipeline_mode<synchronous>, transform_indices = @transform_1, window_bounds = array<i64: 256, 128>}, {pipeline_mode = #tpu.pipeline_mode<synchronous>, transform_indices = @transform_2, window_bounds = array<i64: 1, 128>}, {transform_indices = @transform_3, window_bounds = array<i64: 8, 128>}]} {
    %c0 = arith.constant 0 : index
    %c0_0 = arith.constant 0 : index
    %0 = vector.load %arg2[%c0, %c0_0] : memref<8x256xbf16, #tpu.memory_space<vmem>>, vector<8x256xbf16>
    %c0_1 = arith.constant 0 : index
    %c0_2 = arith.constant 0 : index
    %1 = vector.load %arg3[%c0_1, %c0_2] : memref<256x128xbf16, #tpu.memory_space<vmem>>, vector<256x128xbf16>
    %cst = arith.constant dense<0.000000e+00> : vector<8x128xf32>
    %2 = tpu.matmul %0, %1, %cst {dimension_numbers = #tpu.dot_dimension_numbers<[1], [0], [0], [1], [0, 0, 1, 1], [], []>} : vector<8x256xbf16>, vector<256x128xbf16>, vector<8x128xf32> -> vector<8x128xf32>
    %c0_3 = arith.constant 0 : index
    %c0_4 = arith.constant 0 : index
    %3 = vector.load %arg4[%c0_3, %c0_4] : memref<1x128xf32, #tpu.memory_space<vmem>>, vector<1x128xf32>
    %4 = vector.broadcast %3 : vector<1x128xf32> to vector<8x128xf32>
    %5 = arith.addf %2, %4 : vector<8x128xf32>
    %6 = arith.truncf %5 : vector<8x128xf32> to vector<8x128xbf16>
    %c0_5 = arith.constant 0 : index
    %c0_6 = arith.constant 0 : index
    %7 = vector.load %arg5[%c0_5, %c0_6] : memref<8x128xbf16, #tpu.memory_space<vmem>>, vector<8x128xbf16>
    tpu.vector_store %arg5[%c0_5, %c0_6], %6 {strides = array<i32>} : memref<8x128xbf16, #tpu.memory_space<vmem>>, vector<8x128xbf16>,
    return
  }
  func.func @transform_0(%arg0: i32, %arg1: i32) -> (i32, i32) {
    %c0_i32 = arith.constant 0 : i32
    %c0_i32_0 = arith.constant 0 : i32
    return %arg1, %c0_i32 : i32, i32
  }
  func.func @transform_1(%arg0: i32, %arg1: i32) -> (i32, i32) {
    %c0_i32 = arith.constant 0 : i32
    %c0_i32_0 = arith.constant 0 : i32
    return %c0_i32, %arg0 : i32, i32
  }
  func.func @transform_2(%arg0: i32, %arg1: i32) -> (i32, i32) {
    %c0_i32 = arith.constant 0 : i32
    %c0_i32_0 = arith.constant 0 : i32
    return %c0_i32, %arg0 : i32, i32
  }
  func.func @transform_3(%arg0: i32, %arg1: i32) -> (i32, i32) {
    %c0_i32 = arith.constant 0 : i32
    return %arg1, %arg0 : i32, i32
  }
}

</mosaic_0001>

<llo_original>
// kernel: _lambda_.1
$region0: #{_lambda_.1}
  #allocation0 [shape = 'u32[]', space=smem, size = 0x4, offset = 0x4, fixed_abs, tag = 'smem constant byte address 0x4 - core index']
  #allocation1 [shape = 'u32[144,128]{1,0:T(1,128)}', space=vmem, size = 0x12000, scoped, tag = 'internal scratch']
  %s0 = inlined_call_operand.vmem [shape: bf16[8,256], index: 0, kind: input, shape index: {}]
  %s1 = inlined_call_operand.vmem [shape: bf16[256,128], index: 1, kind: input, shape index: {}]
  %s2 = inlined_call_operand.vmem [shape: f32[1,128], index: 2, kind: input, shape index: {}]
  %s3 = inlined_call_operand.hbm [shape: bf16[8,128], index: 3, kind: output, shape index: {}]
  %s4 = sld [smem:[#allocation0]]
  $region22: #{_lambda_.1} parent=0
    _
  %s6 = ssub.s32 1, %s4
  %s7 = scalar_select 0, %s6, %s4
  $region1: #{_lambda_.1} parent=0
    #allocation2 [shape = 'u8[2048]{0}', space=vmem, size = 0x800, scoped, tag = 'output window, operand 0, single buffered']
    #allocation3 [shape = 's32[1]{0}', space=sflag, size = 0x4, scoped, tag = 'scoped memory for _lambda_.1']
    %8 = vsyncpa [#allocation3], 0
    // Predicated region
    $region2: #{_lambda_.1} parent=1 // pred_check
      _
    $region3: #{_lambda_.1} parent=1 // pred_check_branch
      %10 = sbr.rel (0) target = $region5
    $region4: #{_lambda_.1} parent=1 // pred_region
      _
    $region5: #{_lambda_.1} parent=1 // pred_fallthru
      _
    // Predicated region
    $region6: #{_lambda_.1} parent=1 // pred_check
      _
    $region7: #{_lambda_.1} parent=1 // pred_check_branch
      %12 = sbr.rel (0) target = $region9
    $region8: #{_lambda_.1} parent=1 // pred_region
      _
    $region9: #{_lambda_.1} parent=1 // pred_fallthru
      _
    // Predicated region
    $region10: #{_lambda_.1} parent=1 // pred_check
      _
    $region11: #{_lambda_.1} parent=1 // pred_check_branch
      %14 = sbr.rel (0) target = $region13
    $region12: #{_lambda_.1} parent=1 // pred_region
      _
    $region13: #{_lambda_.1} parent=1 // pred_fallthru
      _
    %v16 = vld [vmem:[%s0] sm:$0xff]
    %v17 = vld [vmem:[%s1] sm:$0xf]
    %v18 = vld [vmem:[%s1 + $0x4] sm:$0xf]
    %v19 = vld [vmem:[%s1 + $0x8] sm:$0xf]
    %v20 = vld [vmem:[%s1 + $0xc] sm:$0xf]
    %v21 = vld [vmem:[%s1 + $0x10] sm:$0xf]
    %v22 = vld [vmem:[%s1 + $0x14] sm:$0xf]
    %v23 = vld [vmem:[%s1 + $0x18] sm:$0xf]
    %v24 = vld [vmem:[%s1 + $0x1c] sm:$0xf]
    %v25 = vld [vmem:[%s1 + $0x20] sm:$0xf]
    %v26 = vld [vmem:[%s1 + $0x24] sm:$0xf]
    %v27 = vld [vmem:[%s1 + $0x28] sm:$0xf]
    %v28 = vld [vmem:[%s1 + $0x2c] sm:$0xf]
    %v29 = vld [vmem:[%s1 + $0x30] sm:$0xf]
    %v30 = vld [vmem:[%s1 + $0x34] sm:$0xf]
    %v31 = vld [vmem:[%s1 + $0x38] sm:$0xf]
    %v32 = vld [vmem:[%s1 + $0x3c] sm:$0xf]
    %v33 = vld [vmem:[%s1 + $0x40] sm:$0xf]
    %v34 = vld [vmem:[%s1 + $0x44] sm:$0xf]
    %v35 = vld [vmem:[%s1 + $0x48] sm:$0xf]
    %v36 = vld [vmem:[%s1 + $0x4c] sm:$0xf]
    %v37 = vld [vmem:[%s1 + $0x50] sm:$0xf]
    %v38 = vld [vmem:[%s1 + $0x54] sm:$0xf]
    %v39 = vld [vmem:[%s1 + $0x58] sm:$0xf]
    %v40 = vld [vmem:[%s1 + $0x5c] sm:$0xf]
    %v41 = vld [vmem:[%s1 + $0x60] sm:$0xf]
    %v42 = vld [vmem:[%s1 + $0x64] sm:$0xf]
    %v43 = vld [vmem:[%s1 + $0x68] sm:$0xf]
    %v44 = vld [vmem:[%s1 + $0x6c] sm:$0xf]
    %v45 = vld [vmem:[%s1 + $0x70] sm:$0xf]
    %v46 = vld [vmem:[%s1 + $0x74] sm:$0xf]
    %v47 = vld [vmem:[%s1 + $0x78] sm:$0xf]
    %v48 = vld [vmem:[%s1 + $0x7c] sm:$0xf]
    %v49 = vld [vmem:[%s2] sm:$0x1]
    %v51 = vlaneseq
    %v52 = vshrl.u32 %v51, 7
    %v53 = vsub.s32 0, %v52
    %v54 = vrot.slane %v49, %v53
    %v57 = vunpack.c.l.b16 %v16
    %v58 = vunpack.c.h.b16 %v16
    %v59 = vpack.c.b16 %v57, %v57
    %v60 = vpack.c.b16 %v58, %v58
    %v95 = vunpack.c.l.b16 %v17
    %v96 = vunpack.c.l.b16 %v18
    %v97 = vunpack.c.l.b16 %v19
    %v98 = vunpack.c.l.b16 %v20
    %v99 = vunpack.c.l.b16 %v21
    %v100 = vunpack.c.l.b16 %v22
    %v101 = vunpack.c.l.b16 %v23
    %v102 = vunpack.c.l.b16 %v24
    %v103 = vunpack.c.l.b16 %v25
    %v104 = vunpack.c.l.b16 %v26
    %v105 = vunpack.c.l.b16 %v27
    %v106 = vunpack.c.l.b16 %v28
    %v107 = vunpack.c.l.b16 %v29
    %v108 = vunpack.c.l.b16 %v30
    %v109 = vunpack.c.l.b16 %v31
    %v110 = vunpack.c.l.b16 %v32
    %v111 = vunpack.c.l.b16 %v33
    %v112 = vunpack.c.l.b16 %v34
    %v113 = vunpack.c.l.b16 %v35
    %v114 = vunpack.c.l.b16 %v36
    %v115 = vunpack.c.l.b16 %v37
    %v116 = vunpack.c.l.b16 %v38
    %v117 = vunpack.c.l.b16 %v39
    %v118 = vunpack.c.l.b16 %v40
    %v119 = vunpack.c.l.b16 %v41
    %v120 = vunpack.c.l.b16 %v42
    %v121 = vunpack.c.l.b16 %v43
    %v122 = vunpack.c.l.b16 %v44
    %v123 = vunpack.c.l.b16 %v45
    %v124 = vunpack.c.l.b16 %v46
    %v125 = vunpack.c.l.b16 %v47
    %v126 = vunpack.c.l.b16 %v48
    %v127 = vpack.c.b16 %v96, %v95
    %v128 = vpack.c.b16 %v98, %v97
    %v129 = vpack.c.b16 %v100, %v99
    %v130 = vpack.c.b16 %v102, %v101
    %v131 = vpack.c.b16 %v104, %v103
    %v132 = vpack.c.b16 %v106, %v105
    %v133 = vpack.c.b16 %v108, %v107
    %v134 = vpack.c.b16 %v110, %v109
    %v135 = vpack.c.b16 %v112, %v111
    %v136 = vpack.c.b16 %v114, %v113
    %v137 = vpack.c.b16 %v116, %v115
    %v138 = vpack.c.b16 %v118, %v117
    %v139 = vpack.c.b16 %v120, %v119
    %v140 = vpack.c.b16 %v122, %v121
    %v141 = vpack.c.b16 %v124, %v123
    %v142 = vpack.c.b16 %v126, %v125
    %159 = vmatprep.subr.bf16.mxu0 0
    %160 = vmatpush1.bf16.msra.mxu0 %v134
    %161 = vmatprep.subr.bf16.mxu0 0
    %162 = vmatpush1.bf16.msra.mxu0 %v133
    %163 = vmatprep.subr.bf16.mxu0 0
    %164 = vmatpush1.bf16.msra.mxu0 %v132
    %165 = vmatprep.subr.bf16.mxu0 0
    %166 = vmatpush1.bf16.msra.mxu0 %v131
    %167 = vmatprep.subr.bf16.mxu0 0
    %168 = vmatpush1.bf16.msra.mxu0 %v130
    %169 = vmatprep.subr.bf16.mxu0 0
    %170 = vmatpush1.bf16.msra.mxu0 %v129
    %171 = vmatprep.subr.bf16.mxu0 0
    %172 = vmatpush1.bf16.msra.mxu0 %v128
    %173 = vmatprep.subr.bf16.mxu0 0
    %174 = vmatpush1.bf16.msra.mxu0 %v127
    %175 = vmatprep.subr.bf16.mxu0 0
    %176 = vmatpush2.bf16.msra.mxu0 %v142
    %177 = vmatprep.subr.bf16.mxu0 0
    %178 = vmatpush2.bf16.msra.mxu0 %v141
    %179 = vmatprep.subr.bf16.mxu0 0
    %180 = vmatpush2.bf16.msra.mxu0 %v140
    %181 = vmatprep.subr.bf16.mxu0 0
    %182 = vmatpush2.bf16.msra.mxu0 %v139
    %183 = vmatprep.subr.bf16.mxu0 0
    %184 = vmatpush2.bf16.msra.mxu0 %v138
    %185 = vmatprep.subr.bf16.mxu0 0
    %186 = vmatpush2.bf16.msra.mxu0 %v137
    %187 = vmatprep.subr.bf16.mxu0 0
    %188 = vmatpush2.bf16.msra.mxu0 %v136
    %189 = vmatprep.subr.bf16.mxu0 0
    %190 = vmatpush2.bf16.msra.mxu0 %v135
    %191 = vmatprep.mubr.bf16.mxu0 %v60
    %192 = vmatmul.mubr.bf16.gmra.mxu0 %v59
    %v193 = vpop.f32.mrf.mxu0
    %v194 = vadd.f32 %v54, %v193
    %v195 = vpop.f32.mrf.mxu0
    %v196 = vpop.f32.mrf.mxu0
    %v197 = vpop.f32.mrf.mxu0
    %198 = vdwg.mxu0
    %v199 = vpack.c.bf16 %v194, %v194
    %200 = vst [vmem:[#allocation2] sm:$0xf] %v199
    // Predicated region
    $region14: #{_lambda_.1} parent=1 // pred_check
      _
    $region15: #{_lambda_.1} parent=1 // pred_check_branch
      %202 = sbr.rel (0) target = $region17
    $region16: #{_lambda_.1} parent=1 // pred_region
      %s204 = ssub.s32 64, 64
      %205 = vsyncadd [#allocation3], %s204
      %s207 = sshll.u32 [#allocation2], 4
      %s208 = int_to_ptr.vmem [resolvable:$true] %s207
      %210 = dma.vmem_to_hbm [thread:$0]  %s208, 64, %s3, [#allocation3]
    $region17: #{_lambda_.1} parent=1 // pred_fallthru
      _
    // Predicated region
    $region18: #{_lambda_.1} parent=1 // pred_check
      _
    $region19: #{_lambda_.1} parent=1 // pred_check_branch
      %212 = sbr.rel (0) target = $region21
    $region20: #{_lambda_.1} parent=1 // pred_region
      %213 = dma.done [#allocation3], 64
    $region21: #{_lambda_.1} parent=1 // pred_fallthru
      _
    %214 = vsyncpa [#allocation3], 1

</llo_original>
